<compile_context>
chip_gen: v6e
topology: v6e:2x2x1
jax: 0.10.0
libtpu: 0.0.40
codegen_flags: <defaults>
</compile_context>

<pallas_src>
import functools

import jax
import jax.numpy as jnp
from jax.experimental import pallas as pl
from jax.experimental.pallas import tpu as pltpu


def _loss_softmax_rows_kernel(x_ref, label_ref, loss_ref, correct_ref, *, rows_valid):
    """Writes per-row [cross-entropy loss, correct@1] partials for one (TB, C) block.

    rows_valid: static int or None. If not None, only the first `rows_valid` rows of
    this block are real data (remainder block); the rest contribute zeros.
    """
    x = x_ref[...]                               # (TB, C), kept in input dtype
    labels = label_ref[...]                      # (TB, 1) int32
    TB, C = x.shape

    # Hoisted column iota, reused by the one-hot gather and the tie-breaking argmax.
    col = jax.lax.broadcasted_iota(jnp.int32, (TB, C), 1)

    # Row max in the input dtype (shared by softmax shift and argmax).
    m = jnp.max(x, axis=-1, keepdims=True)       # (TB, 1)

    # Numerically stable logsumexp: only the exp/sum path is promoted to f32.
    z = (x - m).astype(jnp.float32)
    lse = jnp.log(jnp.sum(jnp.exp(z), axis=-1, keepdims=True)) + m.astype(jnp.float32)

    # x[row, label] via one-hot select+sum (exactly one nonzero per row -> exact in bf16).
    onehot = col == labels
    x_y = jnp.sum(jnp.where(onehot, x, 0), axis=-1, keepdims=True).astype(jnp.float32)

    per_row_loss = lse - x_y                     # (TB, 1) f32

    # Top-1 prediction = lowest index attaining the max (matches torch.topk tie order).
    # (Cheaper alternative `correct = (x_y == m)` changes behavior on exact float ties.)
    idx = jnp.where(x == m, col, jnp.int32(C))
    pred = jnp.min(idx, axis=-1, keepdims=True)  # (TB, 1) int32
    correct = (pred == labels).astype(jnp.float32)

    if rows_valid is not None:                   # static -> only emitted for the remainder block
        row = jax.lax.broadcasted_iota(jnp.int32, (TB, 1), 0)
        valid = row < rows_valid
        per_row_loss = jnp.where(valid, per_row_loss, 0.0)
        correct = jnp.where(valid, correct, 0.0)

    loss_ref[...] = per_row_loss
    correct_ref[...] = correct


def _round_up(n, m):
    return ((n + m - 1) // m) * m


def _pick_block_rows(B, C, in_itemsize, max_block_rows, vmem_budget_bytes):
    # Per row of a (tb, C) block: double-buffered input + ~3 f32 (tb, C) compute temps
    # (exp / select intermediates) + tiny label/output rows.
    per_row = C * (2 * in_itemsize + 3 * 4) + 3 * 4
    cap = max(8, (vmem_budget_bytes // per_row) // 8 * 8)
    mbr = max(8, (max_block_rows // 8) * 8)
    tb = max(8, min(mbr, cap))
    if B >= 8:
        tb = min(tb, (B // 8) * 8)               # guarantee >=1 full tile when B >= 8
    return max(8, tb)


def loss_softmax(x, label, *, max_block_rows=512, vmem_budget_bytes=20 * 1024 * 1024):
    """x: (B, C) float logits, label: (B,) int. Returns (nloss, prec1) scalars."""
    B, C = x.shape
    label2d = label.astype(jnp.int32).reshape(B, 1)

    tb = _pick_block_rows(B, C, jnp.dtype(x.dtype).itemsize, max_block_rows, vmem_budget_bytes)
    num_full = B // tb
    rem = B - num_full * tb

    compiler_params = pltpu.CompilerParams(
        dimension_semantics=("parallel",),           # safe: every block writes disjoint rows
        vmem_limit_bytes=32 * 1024 * 1024,           # <= physical VMEM on v5e/v6e/v7x
    )

    loss_sum = jnp.float32(0.0)
    correct_sum = jnp.float32(0.0)

    # Main call: grid covers only the full (tb, C) tiles of x -- no padding, no copy.
    if num_full > 0:
        n_main = num_full * tb
        kernel = functools.partial(_loss_softmax_rows_kernel, rows_valid=None)
        loss_rows, correct_rows = pl.pallas_call(
            kernel,
            out_shape=(
                jax.ShapeDtypeStruct((n_main, 1), jnp.float32),
                jax.ShapeDtypeStruct((n_main, 1), jnp.float32),
            ),
            grid=(num_full,),
            in_specs=[
                pl.BlockSpec((tb, C), lambda i: (i, 0)),
                pl.BlockSpec((tb, 1), lambda i: (i, 0)),
            ],
            out_specs=(
                pl.BlockSpec((tb, 1), lambda i: (i, 0)),
                pl.BlockSpec((tb, 1), lambda i: (i, 0)),
            ),
            compiler_params=compiler_params,
        )(x, label2d)
        loss_sum = loss_sum + jnp.sum(loss_rows)
        correct_sum = correct_sum + jnp.sum(correct_rows)

    # Remainder call: < tb rows, padded only within this tiny slice (<= tb-1 row copy).
    if rem > 0:
        start = num_full * tb
        rem_pad = _round_up(rem, 8)
        x_rem = x if start == 0 else x[start:]
        lab_rem = label2d if start == 0 else label2d[start:]
        if rem_pad != rem:
            x_rem = jnp.pad(x_rem, ((0, rem_pad - rem), (0, 0)))
            lab_rem = jnp.pad(lab_rem, ((0, rem_pad - rem), (0, 0)))
        kernel = functools.partial(
            _loss_softmax_rows_kernel,
            rows_valid=None if rem_pad == rem else rem,
        )
        loss_r, corr_r = pl.pallas_call(
            kernel,
            out_shape=(
                jax.ShapeDtypeStruct((rem_pad, 1), jnp.float32),
                jax.ShapeDtypeStruct((rem_pad, 1), jnp.float32),
            ),
            grid=(1,),
            in_specs=[
                pl.BlockSpec((rem_pad, C), lambda i: (i, 0)),
                pl.BlockSpec((rem_pad, 1), lambda i: (i, 0)),
            ],
            out_specs=(
                pl.BlockSpec((rem_pad, 1), lambda i: (i, 0)),
                pl.BlockSpec((rem_pad, 1), lambda i: (i, 0)),
            ),
            compiler_params=compiler_params,
        )(x_rem, lab_rem)
        loss_sum = loss_sum + jnp.sum(loss_r)
        correct_sum = correct_sum + jnp.sum(corr_r)

    nloss = loss_sum * (1.0 / B)
    prec1 = correct_sum * (100.0 / B)
    return nloss, prec1


if __name__ == "__main__":
    key = jax.random.PRNGKey(0)

    def reference(x, label):
        B = x.shape[0]
        xf = x.astype(jnp.float32)
        logp = jax.nn.log_softmax(xf, axis=-1)
        ref_loss = -jnp.mean(logp[jnp.arange(B), label])
        ref_prec = 100.0 * jnp.mean((jnp.argmax(xf, axis=-1) == label).astype(jnp.float32))
        return ref_loss, ref_prec

    # (B, C, max_block_rows, dtype)
    cases = [
        (8, 32, None, jnp.float32),    # single full tile, no remainder
        (37, 50, None, jnp.float32),   # one full tile + masked remainder block
        (21, 16, 8, jnp.float32),      # multi-block "parallel" main call + remainder
        (24, 64, 8, jnp.bfloat16),     # bf16 inputs: dtype-preserving fast path
    ]
    for B, C, mbr, dtype in cases:
        kx, kl, key = jax.random.split(key, 3)
        x = jax.random.normal(kx, (B, C), dtype=jnp.float32).astype(dtype)
        label = jax.random.randint(kl, (B,), 0, C, dtype=jnp.int32)

        kwargs = {} if mbr is None else {"max_block_rows": mbr}
        nloss, prec1 = jax.jit(functools.partial(loss_softmax, **kwargs))(x, label)
        jax.block_until_ready((nloss, prec1))

        ref_loss, ref_prec = reference(x, label)
        loss_tol = 1e-5 if dtype == jnp.float32 else 5e-2
        assert jnp.allclose(nloss, ref_loss, atol=loss_tol), (B, C, dtype, nloss, ref_loss)
        assert jnp.allclose(prec1, ref_prec, atol=1e-3), (B, C, dtype, prec1, ref_prec)

    print("KERNEL_OK")
</pallas_src>

<mosaic_0001>
module attributes {stable_mosaic.version = 11 : i64} {
  func.func @_loss_softmax_rows_kernel(%arg0: i32, %arg1: memref<8x32xf32, #tpu.memory_space<vmem>>, %arg2: memref<8x1xi32, #tpu.memory_space<vmem>>, %arg3: memref<8x1xf32, #tpu.memory_space<vmem>>, %arg4: memref<8x1xf32, #tpu.memory_space<vmem>>) attributes {dimension_semantics = [#tpu.dimension_semantics<parallel>], iteration_bounds = array<i64: 1>, scalar_prefetch = 0 : i64, scratch_operands = 0 : i64, tpu.core_type = #tpu.core_type<tc>, window_params = [{transform_indices = @transform_0, window_bounds = array<i64: 8, 32>}, {transform_indices = @transform_1, window_bounds = array<i64: 8, 1>}, {transform_indices = @transform_2, window_bounds = array<i64: 8, 1>}, {transform_indices = @transform_3, window_bounds = array<i64: 8, 1>}]} {
    %c0 = arith.constant 0 : index
    %c0_0 = arith.constant 0 : index
    %0 = vector.load %arg1[%c0, %c0_0] : memref<8x32xf32, #tpu.memory_space<vmem>>, vector<8x32xf32>
    %c0_1 = arith.constant 0 : index
    %c0_2 = arith.constant 0 : index
    %1 = vector.load %arg2[%c0_1, %c0_2] : memref<8x1xi32, #tpu.memory_space<vmem>>, vector<8x1xi32>
    %2 = tpu.iota {dimensions = array<i32: 1>} : vector<8x32xi32>
    %cst = arith.constant dense<0xFF800000> : vector<8xf32>
    %3 = vector.multi_reduction <maximumf>, %0, %cst [1] : vector<8x32xf32> to vector<8xf32>
    %4 = vector.shape_cast %3 : vector<8xf32> to vector<8x1xf32>
    %5 = vector.broadcast %4 : vector<8x1xf32> to vector<8x32xf32>
    %6 = arith.subf %0, %5 : vector<8x32xf32>
    %7 = math.exp %6 : vector<8x32xf32>
    %cst_3 = arith.constant dense<0.000000e+00> : vector<8xf32>
    %8 = vector.multi_reduction <add>, %7, %cst_3 [1] : vector<8x32xf32> to vector<8xf32>
    %9 = vector.shape_cast %8 : vector<8xf32> to vector<8x1xf32>
    %10 = math.log %9 : vector<8x1xf32>
    %11 = arith.addf %10, %4 : vector<8x1xf32>
    %12 = vector.broadcast %1 : vector<8x1xi32> to vector<8x32xi32>
    %13 = arith.cmpi eq, %2, %12 : vector<8x32xi32>
    %c0_i32 = arith.constant 0 : i32
    %14 = arith.sitofp %c0_i32 : i32 to f32
    %15 = vector.broadcast %14 : f32 to vector<8x32xf32>
    %16 = arith.select %13, %0, %15 : vector<8x32xi1>, vector<8x32xf32>
    %cst_4 = arith.constant dense<0.000000e+00> : vector<8xf32>
    %17 = vector.multi_reduction <add>, %16, %cst_4 [1] : vector<8x32xf32> to vector<8xf32>
    %18 = vector.shape_cast %17 : vector<8xf32> to vector<8x1xf32>
    %19 = arith.subf %11, %18 : vector<8x1xf32>
    %20 = vector.broadcast %4 : vector<8x1xf32> to vector<8x32xf32>
    %21 = arith.cmpf oeq, %0, %20 : vector<8x32xf32>
    %c32_i32 = arith.constant 32 : i32
    %22 = vector.broadcast %c32_i32 : i32 to vector<8x32xi32>
    %23 = arith.select %21, %2, %22 : vector<8x32xi1>, vector<8x32xi32>
    %cst_5 = arith.constant dense<2147483647> : vector<8xi32>
    %24 = vector.multi_reduction <minsi>, %23, %cst_5 [1] : vector<8x32xi32> to vector<8xi32>
    %25 = vector.shape_cast %24 : vector<8xi32> to vector<8x1xi32>
    %26 = arith.cmpi eq, %25, %1 : vector<8x1xi32>
    %27 = arith.extui %26 : vector<8x1xi1> to vector<8x1xi32>
    %28 = arith.sitofp %27 : vector<8x1xi32> to vector<8x1xf32>
    %c0_6 = arith.constant 0 : index
    %c0_7 = arith.constant 0 : index
    %29 = vector.load %arg3[%c0_6, %c0_7] : memref<8x1xf32, #tpu.memory_space<vmem>>, vector<8x1xf32>
    tpu.vector_store %arg3[%c0_6, %c0_7], %19 {strides = array<i32>} : memref<8x1xf32, #tpu.memory_space<vmem>>, vector<8x1xf32>,
    %c0_8 = arith.constant 0 : index
    %c0_9 = arith.constant 0 : index
    %30 = vector.load %arg4[%c0_8, %c0_9] : memref<8x1xf32, #tpu.memory_space<vmem>>, vector<8x1xf32>
    tpu.vector_store %arg4[%c0_8, %c0_9], %28 {strides = array<i32>} : memref<8x1xf32, #tpu.memory_space<vmem>>, vector<8x1xf32>,
    return
  }
  func.func @transform_0(%arg0: i32) -> (i32, i32) {
    %c0_i32 = arith.constant 0 : i32
    %c0_i32_0 = arith.constant 0 : i32
    return %arg0, %c0_i32 : i32, i32
  }
  func.func @transform_1(%arg0: i32) -> (i32, i32) {
    %c0_i32 = arith.constant 0 : i32
    %c0_i32_0 = arith.constant 0 : i32
    return %arg0, %c0_i32 : i32, i32
  }
  func.func @transform_2(%arg0: i32) -> (i32, i32) {
    %c0_i32 = arith.constant 0 : i32
    %c0_i32_0 = arith.constant 0 : i32
    return %arg0, %c0_i32 : i32, i32
  }
  func.func @transform_3(%arg0: i32) -> (i32, i32) {
    %c0_i32 = arith.constant 0 : i32
    %c0_i32_0 = arith.constant 0 : i32
    return %arg0, %c0_i32 : i32, i32
  }
}

</mosaic_0001>

<llo_original>
// kernel: loss_softmax.1
$region0: #{loss_softmax.1}
  #allocation0 [shape = 'u32[]', space=smem, size = 0x4, offset = 0x4, fixed_abs, tag = 'smem constant byte address 0x4 - core index']
  #allocation1 [shape = 'u32[144,128]{1,0:T(1,128)}', space=vmem, size = 0x12000, scoped, tag = 'internal scratch']
  %s0 = inlined_call_operand.vmem [shape: f32[8,32], index: 0, kind: input, shape index: {}]
  %s1 = inlined_call_operand.vmem [shape: s32[8,1], index: 1, kind: input, shape index: {}]
  %s2 = inlined_call_operand.vmem [shape: f32[8,1], index: 2, kind: output, shape index: {0}]
  %s3 = inlined_call_operand.vmem [shape: f32[8,1], index: 3, kind: output, shape index: {1}]
  %4 = xla_tuple %s2, %s3
  %s5 = sld [smem:[#allocation0]]
  $region26: #{loss_softmax.1} parent=0
    _
  %s7 = ssub.s32 1, %s5
  %s8 = scalar_select 0, %s7, %s5
  // Predicated region
  $region2: #{loss_softmax.1} parent=0 // pred_check
    _
  $region3: #{loss_softmax.1} parent=0 // pred_check_branch
    %10 = sbr.rel (0) target = $region5
  $region4: #{loss_softmax.1} parent=0 // pred_region
    _
  $region5: #{loss_softmax.1} parent=0 // pred_fallthru
    _
  // Predicated region
  $region6: #{loss_softmax.1} parent=0 // pred_check
    _
  $region7: #{loss_softmax.1} parent=0 // pred_check_branch
    %12 = sbr.rel (0) target = $region9
  $region8: #{loss_softmax.1} parent=0 // pred_region
    _
  $region9: #{loss_softmax.1} parent=0 // pred_fallthru
    _
  %v13 = vld [vmem:[%s0] sm:$0xff]
  %v14 = vld [vmem:[%s1] sm:$0xff]
  %v15 = vlaneseq
  %v16 = vand.u32 %v15, 127
  %vm17 = vcmask 261120
  %v18 = vsel %vm17, %v13, -inf
  %19 = vmax.xlane.f32.xlu0 %v18
  %v20 = vpop.xlane.xlu0 %19
  %v21 = vsub.f32 %v13, %v20
  %v22 = vmul.f32 %v21, 1.442695
  %v23 = vpow.pop %v22
  %v24 = vsel %vm17, %v23, 0.0
  %25 = vadd.xlane.f32.xlu0 %v24
  %v26 = vpop.xlane.xlu0 %25
  %v27 = vlog2.pop %v26
  %v28 = vmul.f32 %v27, 0.6931472
  %v29 = vadd.f32 %v28, %v20
  %30 = vset.pattern.permute.xlu0 0
  %31 = vperm.xlu0 %30, %v14
  %v32 = vpop.permute.xlu0 %31
  %vm33 = vcmp.eq.s32.totalorder %v16, %v32
  %v34 = vsel %vm33, %v13, 0.0
  %v35 = vsel %vm17, %v34, 0.0
  %36 = vadd.xlane.f32.xlu0 %v35
  %v37 = vpop.xlane.xlu0 %36
  %v38 = vsub.f32 %v29, %v37
  %vm39 = vcmp.eq.f32.partialorder %v13, %v20
  %v40 = vsel %vm39, %v16, 32
  %v41 = vsel %vm17, %v40, 2147483647
  %v42 = vand.u32 %v41, 65535
  %v43 = vshra.s32 %v41, 16
  %v44 = vcvt.s32.f32 %v42
  %v45 = vcvt.s32.f32 %v43
  %46 = vmin.xlane.f32.xlu0 %v45
  %v47 = vpop.xlane.xlu0 %46
  %vm48 = vcmp.eq.f32.partialorder %v45, %v47
  %v49 = vsel %vm48, %v44, inf
  %50 = vmin.xlane.f32.xlu0 %v49
  %v51 = vpop.xlane.xlu0 %50
  %v52 = vcvt.f32.s32 %v51
  %v53 = vcvt.f32.s32 %v47
  %v54 = vshll.u32 %v53, 16
  %v55 = vadd.s32 %v54, %v52
  %vm56 = vcmp.eq.s32.totalorder %v55, %v14
  %v57 = vsel %vm56, 1, 0
  %v58 = vcvt.s32.f32 %v57
  %vm59 = vcmask 7168
  %60 = vst.msk [vmem:[%s2] sm:$0xff] %vm59, %v38
  %61 = vst.msk [vmem:[%s3] sm:$0xff] %vm59, %v58
  // Predicated region
  $region10: #{loss_softmax.1} parent=0 // pred_check
    _
  $region11: #{loss_softmax.1} parent=0 // pred_check_branch
    %63 = sbr.rel (0) target = $region13
  $region12: #{loss_softmax.1} parent=0 // pred_region
    _
  $region13: #{loss_softmax.1} parent=0 // pred_fallthru
    _
  // Predicated region
  $region14: #{loss_softmax.1} parent=0 // pred_check
    _
  $region15: #{loss_softmax.1} parent=0 // pred_check_branch
    %65 = sbr.rel (0) target = $region17
  $region16: #{loss_softmax.1} parent=0 // pred_region
    _
  $region17: #{loss_softmax.1} parent=0 // pred_fallthru
    _
  // Predicated region
  $region18: #{loss_softmax.1} parent=0 // pred_check
    _
  $region19: #{loss_softmax.1} parent=0 // pred_check_branch
    %67 = sbr.rel (0) target = $region21
  $region20: #{loss_softmax.1} parent=0 // pred_region
    _
  $region21: #{loss_softmax.1} parent=0 // pred_fallthru
    _
  // Predicated region
  $region22: #{loss_softmax.1} parent=0 // pred_check
    _
  $region23: #{loss_softmax.1} parent=0 // pred_check_branch
    %69 = sbr.rel (0) target = $region25
  $region24: #{loss_softmax.1} parent=0 // pred_region
    _
  $region25: #{loss_softmax.1} parent=0 // pred_fallthru
    _

</llo_original>
